<compile_context>
chip_gen: v7x
topology: tpu7x:2x2x1
jax: 0.10.0
libtpu: 0.0.40
codegen_flags: <defaults>
</compile_context>

<pallas_src>
import numpy as np

import jax
import jax.numpy as jnp
from jax.experimental import pallas as pl
from jax.experimental.pallas import tpu as pltpu

_W = (300.0, 1.0, 200.0)          # per-feature weights from the PyTorch module
_LANES = 128                       # TPU vreg lane width
_SUBLANES = 8                      # f32 sublane count
_DEFAULT_MAX_BLOCK_ROWS = 2048     # ~1 MiB per f32 input block
_PALLAS_MIN_ELEMS = 64 * 1024      # below this, plain jnp beats pallas_call overhead


def _wmae_kernel(t1_ref, t2_ref, w_ref, o_ref, acc_ref):
    """One lane-dense (rows_block, 128) tile: weighted |t1 - t2| partial sum.

    w_ref already holds w[flat_idx % n_feature] / n_sample, so the finalize step
    is a single store (no divide, no broadcast built in-kernel).
    """
    i = pl.program_id(0)

    @pl.when(i == 0)
    def _init():
        acc_ref[...] = jnp.zeros_like(acc_ref)

    # abs-diff in the input dtype; multiplying by the f32 weight tile promotes
    # to f32 for the accumulation.
    diff = jnp.abs(t1_ref[...] - t2_ref[...])
    acc_ref[...] = acc_ref[...] + jnp.sum(diff * w_ref[...])

    @pl.when(i == pl.num_programs(0) - 1)
    def _finalize():
        o_ref[...] = acc_ref[...]


def _round_up(x, m):
    return ((x + m - 1) // m) * m


def wmae(t1, t2, *, force_pallas=False, max_block_rows=_DEFAULT_MAX_BLOCK_ROWS):
    """Weighted MAE matching the PyTorch WMAE.forward. Returns a float32 scalar."""
    t1 = jnp.asarray(t1)
    t2 = jnp.asarray(t2)

    if t2.ndim == 1:
        n_sample, n_feature = t2.shape[0], 1
    elif t2.ndim == 2:
        n_sample, n_feature = t2.shape
    else:
        raise ValueError("WMAE expects 1-D or 2-D inputs")
    if n_feature > len(_W):
        raise ValueError("WMAE only defines weights for up to 3 features")

    total = n_sample * n_feature
    w_row = jnp.asarray(_W[:n_feature], jnp.float32)

    # Tiny inputs: let XLA fuse the whole thing; pallas_call overhead dominates.
    if total < _PALLAS_MIN_ELEMS and not force_pallas:
        d = jnp.abs(t1.astype(jnp.float32) - t2.astype(jnp.float32))
        d = d.reshape(n_sample, n_feature)
        return jnp.sum(d * w_row[None, :]) / jnp.float32(n_sample)

    # ---- lane-dense flattened layout ---------------------------------------
    # Row-major flatten of (n_sample, n_feature): flat index k -> feature k % F.
    # Keep rows_block a multiple of 8 (sublanes) and, for F == 3, of 3 as well,
    # so every block starts at weight-phase 0 and one static slab fits all tiles.
    align = _SUBLANES * (3 if n_feature == 3 else 1)
    rows_needed = pl.cdiv(total, _LANES)
    max_rows = max(align, (max_block_rows // align) * align)
    rows_block = min(max_rows, _round_up(rows_needed, align))
    num_blocks = pl.cdiv(rows_needed, rows_block)
    padded_rows = num_blocks * rows_block
    padded_total = padded_rows * _LANES

    t1_flat = t1.reshape(-1)
    t2_flat = t2.reshape(-1)
    pad = padded_total - total
    if pad:
        # Zero padding in BOTH inputs -> |diff| == 0 -> contributes nothing.
        t1_flat = jnp.pad(t1_flat, (0, pad))
        t2_flat = jnp.pad(t2_flat, (0, pad))
    t1_2d = t1_flat.reshape(padded_rows, _LANES)
    t2_2d = t2_flat.reshape(padded_rows, _LANES)

    # Static periodic weight slab with 1/n_sample folded in.
    slab_idx = np.arange(rows_block * _LANES, dtype=np.int64) % n_feature
    w_slab_np = np.asarray(_W[:n_feature], np.float32)[slab_idx] / np.float32(n_sample)
    w_slab = jnp.asarray(w_slab_np.reshape(rows_block, _LANES))

    out = pl.pallas_call(
        _wmae_kernel,
        out_shape=jax.ShapeDtypeStruct((1, 1), jnp.float32),
        grid_spec=pltpu.PrefetchScalarGridSpec(
            num_scalar_prefetch=0,
            grid=(num_blocks,),
            in_specs=[
                pl.BlockSpec((rows_block, _LANES), lambda i: (i, 0)),
                pl.BlockSpec((rows_block, _LANES), lambda i: (i, 0)),
                # Constant block index -> weight slab stays resident in VMEM.
                pl.BlockSpec((rows_block, _LANES), lambda i: (0, 0)),
            ],
            out_specs=pl.BlockSpec((1, 1), lambda i: (0, 0)),
            scratch_shapes=[pltpu.VMEM((1, 1), jnp.float32)],
        ),
        compiler_params=pltpu.CompilerParams(
            # Single scratch accumulator -> the grid axis is a reduction.
            dimension_semantics=("arbitrary",),
            vmem_limit_bytes=32 * 1024 * 1024,
        ),
    )(t1_2d, t2_2d, w_slab)
    return out[0, 0]


def _wmae_ref(t1, t2):
    """Plain-JAX reference mirroring the PyTorch loops."""
    t1 = jnp.asarray(t1, jnp.float32)
    t2 = jnp.asarray(t2, jnp.float32)
    if t2.ndim == 1:
        n_sample, n_feature = t2.shape[0], 1
        t1 = t1.reshape(n_sample, 1)
        t2 = t2.reshape(n_sample, 1)
    else:
        n_sample, n_feature = t2.shape
    w = jnp.asarray(_W[:n_feature], jnp.float32)
    return jnp.sum(jnp.abs(t1 - t2) * w[None, :]) / n_sample


if __name__ == "__main__":
    key = jax.random.PRNGKey(0)
    k1, k2, k3, k4 = jax.random.split(key, 4)

    # Pallas path, single lane-dense block (2048 samples x 3 features).
    a = jax.random.normal(k1, (2048, 3), dtype=jnp.float32)
    b = jax.random.normal(k2, (2048, 3), dtype=jnp.float32)
    out = jax.block_until_ready(wmae(a, b, force_pallas=True))
    ref = _wmae_ref(a, b)
    assert jnp.allclose(out, ref, rtol=1e-5, atol=1e-4), (out, ref)

    # Pallas path, multi-block grid (exercises init/accumulate/finalize).
    out_mb = jax.block_until_ready(wmae(a, b, force_pallas=True, max_block_rows=24))
    assert jnp.allclose(out_mb, ref, rtol=1e-5, atol=1e-4), (out_mb, ref)

    # Pallas path with tail padding and 2 features (weights [300, 1]).
    c = jax.random.normal(k3, (1000, 2), dtype=jnp.float32)
    d = jax.random.normal(k4, (1000, 2), dtype=jnp.float32)
    out_pad = jax.block_until_ready(wmae(c, d, force_pallas=True))
    ref_pad = _wmae_ref(c, d)
    assert jnp.allclose(out_pad, ref_pad, rtol=1e-5, atol=1e-4), (out_pad, ref_pad)

    # Tiny-input fallback paths (2-D and 1-D), matching the PyTorch branches.
    e = jax.random.normal(k1, (8, 3), dtype=jnp.float32)
    f = jax.random.normal(k2, (8, 3), dtype=jnp.float32)
    out_small = jax.block_until_ready(wmae(e, f))
    assert jnp.allclose(out_small, _wmae_ref(e, f), rtol=1e-5, atol=1e-5)

    g = jax.random.normal(k3, (8,), dtype=jnp.float32)
    h = jax.random.normal(k4, (8,), dtype=jnp.float32)
    out_1d = jax.block_until_ready(wmae(g, h))
    assert jnp.allclose(out_1d, _wmae_ref(g, h), rtol=1e-5, atol=1e-5)

    print("KERNEL_OK")
</pallas_src>

<mosaic_0001>
module attributes {stable_mosaic.version = 11 : i64} {
  func.func @_wmae_kernel(%arg0: i32, %arg1: memref<48x128xf32, #tpu.memory_space<vmem>>, %arg2: memref<48x128xf32, #tpu.memory_space<vmem>>, %arg3: memref<48x128xf32, #tpu.memory_space<vmem>>, %arg4: memref<1x1xf32, #tpu.memory_space<vmem>>, %arg5: memref<1x1xf32, #tpu.memory_space<vmem>>) attributes {dimension_semantics = [#tpu.dimension_semantics<arbitrary>], iteration_bounds = array<i64: 1>, scalar_prefetch = 0 : i64, scratch_operands = 1 : i64, tpu.core_type = #tpu.core_type<tc>, window_params = [{transform_indices = @transform_0, window_bounds = array<i64: 48, 128>}, {transform_indices = @transform_1, window_bounds = array<i64: 48, 128>}, {pipeline_mode = #tpu.pipeline_mode<synchronous>, transform_indices = @transform_2, window_bounds = array<i64: 48, 128>}, {pipeline_mode = #tpu.pipeline_mode<synchronous>, transform_indices = @transform_3, window_bounds = array<i64: 1, 1>}]} {
    %c0_i32 = arith.constant 0 : i32
    %0 = arith.cmpi eq, %arg0, %c0_i32 : i32
    %1 = arith.extui %0 : i1 to i32
    %c0_i32_0 = arith.constant 0 : i32
    %2 = arith.cmpi ne, %1, %c0_i32_0 : i32
    scf.if %2 {
      %cst_12 = arith.constant 0.000000e+00 : f32
      %20 = vector.broadcast %cst_12 : f32 to vector<1x1xf32>
      %c0_13 = arith.constant 0 : index
      %c0_14 = arith.constant 0 : index
      %21 = vector.load %arg5[%c0_13, %c0_14] : memref<1x1xf32, #tpu.memory_space<vmem>>, vector<1x1xf32>
      tpu.vector_store %arg5[%c0_13, %c0_14], %20 {strides = array<i32>} : memref<1x1xf32, #tpu.memory_space<vmem>>, vector<1x1xf32>,
    } else {
    }
    %c0 = arith.constant 0 : index
    %c0_1 = arith.constant 0 : index
    %3 = vector.load %arg1[%c0, %c0_1] : memref<48x128xf32, #tpu.memory_space<vmem>>, vector<48x128xf32>
    %c0_2 = arith.constant 0 : index
    %c0_3 = arith.constant 0 : index
    %4 = vector.load %arg2[%c0_2, %c0_3] : memref<48x128xf32, #tpu.memory_space<vmem>>, vector<48x128xf32>
    %5 = arith.subf %3, %4 : vector<48x128xf32>
    %6 = math.absf %5 : vector<48x128xf32>
    %c0_4 = arith.constant 0 : index
    %c0_5 = arith.constant 0 : index
    %7 = vector.load %arg5[%c0_4, %c0_5] : memref<1x1xf32, #tpu.memory_space<vmem>>, vector<1x1xf32>
    %c0_6 = arith.constant 0 : index
    %c0_7 = arith.constant 0 : index
    %8 = vector.load %arg3[%c0_6, %c0_7] : memref<48x128xf32, #tpu.memory_space<vmem>>, vector<48x128xf32>
    %9 = arith.mulf %6, %8 : vector<48x128xf32>
    %10 = vector.shape_cast %9 : vector<48x128xf32> to vector<1x48x128xf32>
    %cst = arith.constant dense<0.000000e+00> : vector<1xf32>
    %11 = vector.multi_reduction <add>, %10, %cst [1, 2] : vector<1x48x128xf32> to vector<1xf32>
    %12 = vector.shape_cast %11 : vector<1xf32> to vector<1x1x1xf32>
    %13 = vector.extract %12[0, 0, 0] : f32 from vector<1x1x1xf32>
    %14 = vector.broadcast %13 : f32 to vector<1x1xf32>
    %15 = arith.addf %7, %14 : vector<1x1xf32>
    %c0_8 = arith.constant 0 : index
    %c0_9 = arith.constant 0 : index
    %16 = vector.load %arg5[%c0_8, %c0_9] : memref<1x1xf32, #tpu.memory_space<vmem>>, vector<1x1xf32>
    tpu.vector_store %arg5[%c0_8, %c0_9], %15 {strides = array<i32>} : memref<1x1xf32, #tpu.memory_space<vmem>>, vector<1x1xf32>,
    %c0_i32_10 = arith.constant 0 : i32
    %17 = arith.cmpi eq, %arg0, %c0_i32_10 : i32
    %18 = arith.extui %17 : i1 to i32
    %c0_i32_11 = arith.constant 0 : i32
    %19 = arith.cmpi ne, %18, %c0_i32_11 : i32
    scf.if %19 {
      %c0_12 = arith.constant 0 : index
      %c0_13 = arith.constant 0 : index
      %20 = vector.load %arg5[%c0_12, %c0_13] : memref<1x1xf32, #tpu.memory_space<vmem>>, vector<1x1xf32>
      %c0_14 = arith.constant 0 : index
      %c0_15 = arith.constant 0 : index
      %21 = vector.load %arg4[%c0_14, %c0_15] : memref<1x1xf32, #tpu.memory_space<vmem>>, vector<1x1xf32>
      tpu.vector_store %arg4[%c0_14, %c0_15], %20 {strides = array<i32>} : memref<1x1xf32, #tpu.memory_space<vmem>>, vector<1x1xf32>,
    } else {
    }
    return
  }
  func.func @transform_0(%arg0: i32) -> (i32, i32) {
    %c0_i32 = arith.constant 0 : i32
    %c0_i32_0 = arith.constant 0 : i32
    return %arg0, %c0_i32 : i32, i32
  }
  func.func @transform_1(%arg0: i32) -> (i32, i32) {
    %c0_i32 = arith.constant 0 : i32
    %c0_i32_0 = arith.constant 0 : i32
    return %arg0, %c0_i32 : i32, i32
  }
  func.func @transform_2(%arg0: i32) -> (i32, i32) {
    %c0_i32 = arith.constant 0 : i32
    %c0_i32_0 = arith.constant 0 : i32
    %c0_i32_1 = arith.constant 0 : i32
    return %c0_i32, %c0_i32_0 : i32, i32
  }
  func.func @transform_3(%arg0: i32) -> (i32, i32) {
    %c0_i32 = arith.constant 0 : i32
    %c0_i32_0 = arith.constant 0 : i32
    %c0_i32_1 = arith.constant 0 : i32
    return %c0_i32, %c0_i32_0 : i32, i32
  }
}

</mosaic_0001>

<llo_original>
// kernel: tpu_custom_call.1
$region0: #{tpu_custom_call.1}
  #allocation0 [shape = 'u32[]', space=smem, size = 0x4, offset = 0x4, fixed_abs, tag = 'smem constant byte address 0x4 - core index']
  #allocation1 [shape = 'u32[144,128]{1,0:T(1,128)}', space=vmem, size = 0x12000, scoped, tag = 'internal scratch']
  #allocation2 [shape = 'f32[1,1]{1,0:T(1,128)}', space=vmem, size = 0x200, scoped, tag = 'scratch operand']
  %s0 = inlined_call_operand.hbm [shape: f32[48,128], index: 0, kind: input, shape index: {}]
  %s1 = inlined_call_operand.hbm [shape: f32[48,128], index: 1, kind: input, shape index: {}]
  %s2 = inlined_call_operand.hbm [shape: f32[48,128], index: 2, kind: input, shape index: {}]
  %s3 = inlined_call_operand.hbm [shape: f32[1,1], index: 3, kind: output, shape index: {}]
  %s4 = sld [smem:[#allocation0]]
  $region42: #{tpu_custom_call.1} parent=0
    _
  %s6 = ssub.s32 1, %s4
  %s7 = scalar_select 0, %s6, %s4
  $region1: #{tpu_custom_call.1} parent=0
    #allocation3 [shape = 'u8[24576]{0}', space=vmem, size = 0x6000, scoped, tag = 'input window, operand 0, single buffered']
    #allocation4 [shape = 's32[1]{0}', space=sflag, size = 0x4, scoped, tag = 'scoped memory for tpu_custom_call.1']
    #allocation5 [shape = 's32[1]{0}', space=sflag, size = 0x4, scoped, tag = 'scoped memory for tpu_custom_call.1']
    #allocation6 [shape = 'u8[24576]{0}', space=vmem, size = 0x6000, scoped, tag = 'input window, operand 1, single buffered']
    #allocation7 [shape = 's32[1]{0}', space=sflag, size = 0x4, scoped, tag = 'scoped memory for tpu_custom_call.1']
    #allocation8 [shape = 'u8[24576]{0}', space=vmem, size = 0x6000, scoped, tag = 'input window, operand 2, single buffered']
    #allocation9 [shape = 'u8[512]{0}', space=vmem, size = 0x400, scoped, tag = 'output window, operand 0, single buffered']
    %8 = vsyncpa [#allocation4], 0
    %9 = vsyncpa [#allocation7], 0
    %10 = vsyncpa [#allocation5], 0
    // Predicated region
    $region2: #{tpu_custom_call.1} parent=1 // pred_check
      _
    $region3: #{tpu_custom_call.1} parent=1 // pred_check_branch
      %12 = sbr.rel (0) target = $region5
    $region4: #{tpu_custom_call.1} parent=1 // pred_region
      %s14 = ssub.s32 768, 768
      %15 = vsyncadd [#allocation4], %s14
      %s16 = sshll.u32 [#allocation3], 4
      %s17 = int_to_ptr.vmem [resolvable:$true] %s16
      %22 = dma.hbm_to_vmem [thread:$0]  %s0, 768, %s17, [#allocation4], 128, 128, 8
    $region5: #{tpu_custom_call.1} parent=1 // pred_fallthru
      _
    // Predicated region
    $region6: #{tpu_custom_call.1} parent=1 // pred_check
      _
    $region7: #{tpu_custom_call.1} parent=1 // pred_check_branch
      %24 = sbr.rel (0) target = $region9
    $region8: #{tpu_custom_call.1} parent=1 // pred_region
      %s26 = ssub.s32 768, 768
      %27 = vsyncadd [#allocation7], %s26
      %s28 = sshll.u32 [#allocation6], 4
      %s29 = int_to_ptr.vmem [resolvable:$true] %s28
      %34 = dma.hbm_to_vmem [thread:$0]  %s1, 768, %s29, [#allocation7], 128, 128, 8
    $region9: #{tpu_custom_call.1} parent=1 // pred_fallthru
      _
    // Predicated region
    $region10: #{tpu_custom_call.1} parent=1 // pred_check
      _
    $region11: #{tpu_custom_call.1} parent=1 // pred_check_branch
      %36 = sbr.rel (0) target = $region13
    $region12: #{tpu_custom_call.1} parent=1 // pred_region
      %s38 = ssub.s32 768, 768
      %39 = vsyncadd [#allocation7], %s38
      %s40 = sshll.u32 [#allocation8], 4
      %s41 = int_to_ptr.vmem [resolvable:$true] %s40
      %46 = dma.hbm_to_vmem [thread:$0]  %s2, 768, %s41, [#allocation7], 128, 128, 8
    $region13: #{tpu_custom_call.1} parent=1 // pred_fallthru
      _
    // Predicated region
    $region14: #{tpu_custom_call.1} parent=1 // pred_check
      _
    $region15: #{tpu_custom_call.1} parent=1 // pred_check_branch
      %48 = sbr.rel (0) target = $region17
    $region16: #{tpu_custom_call.1} parent=1 // pred_region
      %49 = dma.done [#allocation4], 768
    $region17: #{tpu_custom_call.1} parent=1 // pred_fallthru
      _
    // Predicated region
    $region18: #{tpu_custom_call.1} parent=1 // pred_check
      _
    $region19: #{tpu_custom_call.1} parent=1 // pred_check_branch
      %51 = sbr.rel (0) target = $region21
    $region20: #{tpu_custom_call.1} parent=1 // pred_region
      %52 = dma.done [#allocation7], 768
    $region21: #{tpu_custom_call.1} parent=1 // pred_fallthru
      _
    // Predicated region
    $region22: #{tpu_custom_call.1} parent=1 // pred_check
      _
    $region23: #{tpu_custom_call.1} parent=1 // pred_check_branch
      %54 = sbr.rel (0) target = $region25
    $region24: #{tpu_custom_call.1} parent=1 // pred_region
      %55 = dma.done [#allocation7], 768
    $region25: #{tpu_custom_call.1} parent=1 // pred_fallthru
      _
    %p56 = scmp.eq.s32.totalorder 0, 0
    // Predicated region
    $region26: #{tpu_custom_call.1} parent=1 // pred_check
      %p57 = pneg %p56
    $region27: #{tpu_custom_call.1} parent=1 // pred_check_branch
      %59 = sbr.rel (%p57) target = $region29
    $region28: #{tpu_custom_call.1} parent=1 // pred_region
      %vm60 = vcmask 0
      %61 = vst.msk [vmem:[#allocation2] sm:$0x1] %vm60, 0.0
    $region29: #{tpu_custom_call.1} parent=1 // pred_fallthru
      _
    %v62 = vld [vmem:[#allocation3] sm:$0xff]
    %v63 = vld [vmem:[#allocation3 + $0x8] sm:$0xff]
    %v64 = vld [vmem:[#allocation3 + $0x10] sm:$0xff]
    %v65 = vld [vmem:[#allocation3 + $0x18] sm:$0xff]
    %v66 = vld [vmem:[#allocation3 + $0x20] sm:$0xff]
    %v67 = vld [vmem:[#allocation3 + $0x28] sm:$0xff]
    %v68 = vld [vmem:[#allocation6] sm:$0xff]
    %v69 = vld [vmem:[#allocation6 + $0x8] sm:$0xff]
    %v70 = vld [vmem:[#allocation6 + $0x10] sm:$0xff]
    %v71 = vld [vmem:[#allocation6 + $0x18] sm:$0xff]
    %v72 = vld [vmem:[#allocation6 + $0x20] sm:$0xff]
    %v73 = vld [vmem:[#allocation6 + $0x28] sm:$0xff]
    %v74 = vsub.f32 %v62, %v68
    %v75 = vsub.f32 %v63, %v69
    %v76 = vsub.f32 %v64, %v70
    %v77 = vsub.f32 %v65, %v71
    %v78 = vsub.f32 %v66, %v72
    %v79 = vsub.f32 %v67, %v73
    %v80 = vand.u32 2147483647, %v74
    %v81 = vand.u32 2147483647, %v75
    %v82 = vand.u32 2147483647, %v76
    %v83 = vand.u32 2147483647, %v77
    %v84 = vand.u32 2147483647, %v78
    %v85 = vand.u32 2147483647, %v79
    %v86 = vld [vmem:[#allocation2] sm:$0x1]
    %v87 = vld [vmem:[#allocation8] sm:$0xff]
    %v88 = vld [vmem:[#allocation8 + $0x8] sm:$0xff]
    %v89 = vld [vmem:[#allocation8 + $0x10] sm:$0xff]
    %v90 = vld [vmem:[#allocation8 + $0x18] sm:$0xff]
    %v91 = vld [vmem:[#allocation8 + $0x20] sm:$0xff]
    %v92 = vld [vmem:[#allocation8 + $0x28] sm:$0xff]
    %v93 = vmul.f32 %v80, %v87
    %v94 = vmul.f32 %v81, %v88
    %v95 = vmul.f32 %v82, %v89
    %v96 = vmul.f32 %v83, %v90
    %v97 = vmul.f32 %v84, %v91
    %v98 = vmul.f32 %v85, %v92
    %v99 = vadd.f32 %v93, %v94
    %v100 = vadd.f32 %v99, %v95
    %v101 = vadd.f32 %v100, %v96
    %v102 = vadd.f32 %v101, %v97
    %v103 = vadd.f32 %v102, %v98
    %104 = vadd.xlane.f32.xlu0 %v103
    %v105 = vpop.xlane.xlu0 %104
    %v106 = vrot.slane %v105, 4
    %v107 = vadd.f32 %v105, %v106
    %v108 = vrot.slane %v107, 2
    %v109 = vadd.f32 %v107, %v108
    %v110 = vrot.slane %v109, 1
    %v111 = vadd.f32 %v109, %v110
    %s112 = vtos %v111
    %v113 = vstv %s112
    %v114 = vadd.f32 %v86, %v113
    %vm115 = vcmask 0
    %116 = vst.msk [vmem:[#allocation2] sm:$0x1] %vm115, %v114
    // Predicated region
    $region30: #{tpu_custom_call.1} parent=1 // pred_check
      %p117 = pneg %p56
    $region31: #{tpu_custom_call.1} parent=1 // pred_check_branch
      %119 = sbr.rel (%p117) target = $region33
    $region32: #{tpu_custom_call.1} parent=1 // pred_region
      %v120 = vld [vmem:[#allocation2] sm:$0x1]
      %121 = vst.msk [vmem:[#allocation9] sm:$0x1] %vm115, %v120
    $region33: #{tpu_custom_call.1} parent=1 // pred_fallthru
      _
    // Predicated region
    $region34: #{tpu_custom_call.1} parent=1 // pred_check
      _
    $region35: #{tpu_custom_call.1} parent=1 // pred_check_branch
      %123 = sbr.rel (0) target = $region37
    $region36: #{tpu_custom_call.1} parent=1 // pred_region
      %s125 = ssub.s32 16, 16
      %126 = vsyncadd [#allocation5], %s125
      %s128 = sshll.u32 [#allocation9], 4
      %s129 = int_to_ptr.vmem [resolvable:$true] %s128
      %131 = dma.vmem_to_hbm [thread:$0]  %s129, 16, %s3, [#allocation5]
    $region37: #{tpu_custom_call.1} parent=1 // pred_fallthru
      _
    // Predicated region
    $region38: #{tpu_custom_call.1} parent=1 // pred_check
      _
    $region39: #{tpu_custom_call.1} parent=1 // pred_check_branch
      %133 = sbr.rel (0) target = $region41
    $region40: #{tpu_custom_call.1} parent=1 // pred_region
      %134 = dma.done [#allocation5], 16
    $region41: #{tpu_custom_call.1} parent=1 // pred_fallthru
      _
    %135 = vsyncpa [#allocation4], 1
    %136 = vsyncpa [#allocation7], 1
    %137 = vsyncpa [#allocation5], 1

</llo_original>
